<compile_context>
chip_gen: v7x
topology: tpu7x:2x2x1
jax: 0.10.0
libtpu: 0.0.40
codegen_flags: <defaults>
</compile_context>

<pallas_src>
import functools

import jax
import jax.numpy as jnp
from jax.experimental import pallas as pl
from jax.experimental.pallas import tpu as pltpu

_LANES = 128
# (4096, 128) f32 block = 2 MiB; 2 inputs x 2 pipeline buffers = 8 MiB VMEM per
# core -> fits the default scoped VMEM on v5e (16 MiB) and v6e/v7x (32 MiB).
_MAX_BLOCK_ROWS = 4096


def _bce_sum_kernel(pred_ref, tgt_ref, out_ref, *, rows, block_rows,
                    steps_per_core, mask_needed):
    """Accumulates the un-normalized BCE sum into a per-core resident (8,128) block."""
    c = pl.program_id(0)   # core / parallel axis
    i = pl.program_id(1)   # reduction axis (arbitrary)

    @pl.when(i == 0)
    def _():
        out_ref[...] = jnp.zeros_like(out_ref)

    # Upcast in-kernel (VPU has slack); inputs are DMA'd in their native dtype.
    p = pred_ref[...].astype(jnp.float32)
    t = tgt_ref[...].astype(jnp.float32)

    # PyTorch F.binary_cross_entropy clamps the log terms at -100.
    log_p = jnp.maximum(jnp.log(p), -100.0)
    log_1mp = jnp.maximum(jnp.log(1.0 - p), -100.0)
    # Algebraically identical to -(t*log_p + (1-t)*log_1mp), one fewer multiply.
    loss = -(log_1mp + t * (log_p - log_1mp))

    def _accum(x):
        if block_rows % 8 == 0:
            # Groups whole (8,128) vregs: pure VPU vadds, no cross-lane reduce.
            out_ref[...] += x.reshape(block_rows // 8, 8, _LANES).sum(axis=0)
        else:
            # Tiny single-block inputs whose row count is not a multiple of 8.
            out_ref[0:1, :] += jnp.sum(x, axis=0, keepdims=True)

    if mask_needed:
        # Static branch: only traced when some grid step overruns `rows`.
        global_step = c * steps_per_core + i
        needs_mask = (global_step + 1) * block_rows > rows

        @pl.when(jnp.logical_not(needs_mask))
        def _():
            _accum(loss)  # steady-state: unmasked accumulate

        @pl.when(needs_mask)
        def _():
            # NOTE: rows past `rows` hold undefined (Pallas-padded) or
            # duplicated data; log() of garbage may be NaN/-inf, but jnp.where
            # is a pure elementwise select, so masked rows never leak into the
            # sum.  Phantom (clamped) steps mask out entirely -> add zero.
            row_idx = jax.lax.broadcasted_iota(jnp.int32, loss.shape, 0)
            valid = (global_step * block_rows + row_idx) < rows
            _accum(jnp.where(valid, loss, 0.0))
    else:
        _accum(loss)


def _bce_elem_sum(p, t):
    """Plain-jnp BCE sum for the (tiny, <128-element) non-lane-aligned tail."""
    p = p.astype(jnp.float32)
    t = t.astype(jnp.float32)
    log_p = jnp.maximum(jnp.log(p), -100.0)
    log_1mp = jnp.maximum(jnp.log(1.0 - p), -100.0)
    return jnp.sum(-(log_1mp + t * (log_p - log_1mp)))


def bce_loss(pred, target):
    """Pallas BCE loss with 'mean' reduction. Accepts any-shaped pred/target."""
    assert pred.shape == target.shape
    n = int(pred.size)
    assert n > 0

    p_flat = pred.reshape(-1)
    t_flat = target.reshape(-1)

    rows = n // _LANES
    tail = n - rows * _LANES

    total = jnp.float32(0.0)

    if rows > 0:
        block_rows = min(_MAX_BLOCK_ROWS, rows)
        total_steps = (rows + block_rows - 1) // block_rows
        # Shard the reduction across both TensorCores on v7x; a single-TC chip
        # simply runs both core-chunks sequentially (same cost as before).
        num_cores = 2 if total_steps >= 2 else 1
        steps_per_core = (total_steps + num_cores - 1) // num_cores
        covered_rows = num_cores * steps_per_core * block_rows
        mask_needed = covered_rows != rows

        n_main = rows * _LANES
        # When n is lane-divisible this is a free reshape of the original
        # buffer (no pad, no copy). Only a ragged tail forces a prefix slice.
        p_main = p_flat if tail == 0 else p_flat[:n_main]
        t_main = t_flat if tail == 0 else t_flat[:n_main]
        p2 = p_main.reshape(rows, _LANES)
        t2 = t_main.reshape(rows, _LANES)

        if steps_per_core * num_cores != total_steps:
            # The 2-core split has one phantom step: clamp its block index to a
            # valid block (its contribution is fully masked in the kernel).
            def in_idx(c, i):
                return (jnp.minimum(c * steps_per_core + i, total_steps - 1), 0)
        else:
            def in_idx(c, i):
                return (c * steps_per_core + i, 0)

        partial = pl.pallas_call(
            functools.partial(_bce_sum_kernel, rows=rows, block_rows=block_rows,
                              steps_per_core=steps_per_core,
                              mask_needed=mask_needed),
            out_shape=jax.ShapeDtypeStruct((num_cores, 8, _LANES), jnp.float32),
            grid_spec=pltpu.PrefetchScalarGridSpec(
                num_scalar_prefetch=0,
                grid=(num_cores, steps_per_core),
                in_specs=[
                    pl.BlockSpec((block_rows, _LANES), in_idx),
                    pl.BlockSpec((block_rows, _LANES), in_idx),
                ],
                # Per-core resident accumulator block (leading dim squeezed).
                out_specs=pl.BlockSpec((None, 8, _LANES), lambda c, i: (c, 0, 0)),
            ),
            compiler_params=pltpu.CompilerParams(
                dimension_semantics=("parallel", "arbitrary"),
                vmem_limit_bytes=32 * 1024 * 1024),
        )(p2, t2)

        # Single tiny cross-lane reduce on the (num_cores, 8, 128) partials.
        total = total + jnp.sum(partial)

    if tail > 0:
        total = total + _bce_elem_sum(p_flat[rows * _LANES:],
                                      t_flat[rows * _LANES:])

    return total / jnp.float32(n)  # 'mean' reduction, 0-d result


def _bce_ref(pred, target):
    p = pred.astype(jnp.float32)
    t = target.astype(jnp.float32)
    log_p = jnp.maximum(jnp.log(p), -100.0)
    log_1mp = jnp.maximum(jnp.log(1.0 - p), -100.0)
    return jnp.mean(-(t * log_p + (1.0 - t) * log_1mp))


if __name__ == "__main__":
    key = jax.random.PRNGKey(0)
    k1, k2, k3, k4, k5, k6 = jax.random.split(key, 6)

    # Small NCHW shapes consistent with a segmentation-style prediction map.
    pred = jax.random.uniform(k1, (2, 4, 16, 16), dtype=jnp.float32,
                              minval=1e-4, maxval=1.0 - 1e-4)
    target = (jax.random.uniform(k2, (2, 4, 16, 16)) > 0.5).astype(jnp.float32)
    loss = bce_loss(pred, target)
    jax.block_until_ready(loss)
    ref = _bce_ref(pred, target)
    assert jnp.allclose(loss, ref, rtol=1e-5, atol=1e-6), (loss, ref)

    # Exercise the ragged-tail + non-8-divisible single-block path.
    pred_b = jax.random.uniform(k3, (3, 1, 37, 53), dtype=jnp.float32,
                                minval=1e-4, maxval=1.0 - 1e-4)
    target_b = (jax.random.uniform(k4, (3, 1, 37, 53)) > 0.5).astype(jnp.float32)
    loss_b = bce_loss(pred_b, target_b)
    jax.block_until_ready(loss_b)
    ref_b = _bce_ref(pred_b, target_b)
    assert jnp.allclose(loss_b, ref_b, rtol=1e-5, atol=1e-6), (loss_b, ref_b)

    # Exercise the 2-core grid + partial-last-block masking path.
    pred_c = jax.random.uniform(k5, (2, 4, 288, 288), dtype=jnp.float32,
                                minval=1e-4, maxval=1.0 - 1e-4)
    target_c = (jax.random.uniform(k6, (2, 4, 288, 288)) > 0.5).astype(jnp.float32)
    loss_c = bce_loss(pred_c, target_c)
    jax.block_until_ready(loss_c)
    ref_c = _bce_ref(pred_c, target_c)
    assert jnp.allclose(loss_c, ref_c, rtol=1e-5, atol=1e-6), (loss_c, ref_c)

    print("KERNEL_OK")
</pallas_src>

<mosaic_0001>
module attributes {stable_mosaic.version = 11 : i64} {
  func.func @_bce_sum_kernel(%arg0: i32, %arg1: i32, %arg2: memref<16x128xf32, #tpu.memory_space<vmem>>, %arg3: memref<16x128xf32, #tpu.memory_space<vmem>>, %arg4: memref<1x8x128xf32, #tpu.memory_space<vmem>>) attributes {dimension_semantics = [#tpu.dimension_semantics<parallel>, #tpu.dimension_semantics<arbitrary>], iteration_bounds = array<i64: 1, 1>, scalar_prefetch = 0 : i64, scratch_operands = 0 : i64, tpu.core_type = #tpu.core_type<tc>, window_params = [{transform_indices = @transform_0, window_bounds = array<i64: 16, 128>}, {transform_indices = @transform_1, window_bounds = array<i64: 16, 128>}, {transform_indices = @transform_2, window_bounds = array<i64: 1, 8, 128>}]} {
    %c0_i32 = arith.constant 0 : i32
    %0 = arith.cmpi eq, %arg1, %c0_i32 : i32
    %1 = arith.extui %0 : i1 to i32
    %c0_i32_0 = arith.constant 0 : i32
    %2 = arith.cmpi ne, %1, %c0_i32_0 : i32
    scf.if %2 {
      %cst_14 = arith.constant 0.000000e+00 : f32
      %26 = vector.broadcast %cst_14 : f32 to vector<8x128xf32>
      %c0_15 = arith.constant 0 : index
      %c0_16 = arith.constant 0 : index
      %c0_17 = arith.constant 0 : index
      %27 = vector.load %arg4[%c0_15, %c0_16, %c0_17] : memref<1x8x128xf32, #tpu.memory_space<vmem>>, vector<1x8x128xf32>
      %28 = vector.shape_cast %27 : vector<1x8x128xf32> to vector<8x128xf32>
      %29 = vector.shape_cast %26 : vector<8x128xf32> to vector<1x8x128xf32>
      tpu.vector_store %arg4[%c0_15, %c0_16, %c0_17], %29 {strides = array<i32>} : memref<1x8x128xf32, #tpu.memory_space<vmem>>, vector<1x8x128xf32>,
    } else {
    }
    %c0 = arith.constant 0 : index
    %c0_1 = arith.constant 0 : index
    %3 = vector.load %arg2[%c0, %c0_1] : memref<16x128xf32, #tpu.memory_space<vmem>>, vector<16x128xf32>
    %c0_2 = arith.constant 0 : index
    %c0_3 = arith.constant 0 : index
    %4 = vector.load %arg3[%c0_2, %c0_3] : memref<16x128xf32, #tpu.memory_space<vmem>>, vector<16x128xf32>
    %5 = math.log %3 : vector<16x128xf32>
    %cst = arith.constant -1.000000e+02 : f32
    %6 = vector.broadcast %cst : f32 to vector<16x128xf32>
    %7 = arith.maximumf %5, %6 : vector<16x128xf32>
    %cst_4 = arith.constant 1.000000e+00 : f32
    %8 = vector.broadcast %cst_4 : f32 to vector<16x128xf32>
    %9 = arith.subf %8, %3 : vector<16x128xf32>
    %10 = math.log %9 : vector<16x128xf32>
    %cst_5 = arith.constant -1.000000e+02 : f32
    %11 = vector.broadcast %cst_5 : f32 to vector<16x128xf32>
    %12 = arith.maximumf %10, %11 : vector<16x128xf32>
    %13 = arith.subf %7, %12 : vector<16x128xf32>
    %14 = arith.mulf %4, %13 : vector<16x128xf32>
    %15 = arith.addf %12, %14 : vector<16x128xf32>
    %cst_6 = arith.constant 0.000000e+00 : f32
    %16 = vector.broadcast %cst_6 : f32 to vector<16x128xf32>
    %17 = arith.subf %16, %15 : vector<16x128xf32>
    %c0_7 = arith.constant 0 : index
    %c0_8 = arith.constant 0 : index
    %c0_9 = arith.constant 0 : index
    %18 = vector.load %arg4[%c0_7, %c0_8, %c0_9] : memref<1x8x128xf32, #tpu.memory_space<vmem>>, vector<1x8x128xf32>
    %19 = vector.shape_cast %18 : vector<1x8x128xf32> to vector<8x128xf32>
    %20 = vector.shape_cast %17 : vector<16x128xf32> to vector<2x8x128xf32>
    %cst_10 = arith.constant dense<0.000000e+00> : vector<8x128xf32>
    %21 = vector.multi_reduction <add>, %20, %cst_10 [0] : vector<2x8x128xf32> to vector<8x128xf32>
    %22 = arith.addf %19, %21 : vector<8x128xf32>
    %c0_11 = arith.constant 0 : index
    %c0_12 = arith.constant 0 : index
    %c0_13 = arith.constant 0 : index
    %23 = vector.load %arg4[%c0_11, %c0_12, %c0_13] : memref<1x8x128xf32, #tpu.memory_space<vmem>>, vector<1x8x128xf32>
    %24 = vector.shape_cast %23 : vector<1x8x128xf32> to vector<8x128xf32>
    %25 = vector.shape_cast %22 : vector<8x128xf32> to vector<1x8x128xf32>
    tpu.vector_store %arg4[%c0_11, %c0_12, %c0_13], %25 {strides = array<i32>} : memref<1x8x128xf32, #tpu.memory_space<vmem>>, vector<1x8x128xf32>,
    return
  }
  func.func @transform_0(%arg0: i32, %arg1: i32) -> (i32, i32) {
    %c1_i32 = arith.constant 1 : i32
    %0 = arith.muli %arg0, %c1_i32 : i32
    %1 = arith.addi %0, %arg1 : i32
    %c0_i32 = arith.constant 0 : i32
    %c0_i32_0 = arith.constant 0 : i32
    return %1, %c0_i32 : i32, i32
  }
  func.func @transform_1(%arg0: i32, %arg1: i32) -> (i32, i32) {
    %c1_i32 = arith.constant 1 : i32
    %0 = arith.muli %arg0, %c1_i32 : i32
    %1 = arith.addi %0, %arg1 : i32
    %c0_i32 = arith.constant 0 : i32
    %c0_i32_0 = arith.constant 0 : i32
    return %1, %c0_i32 : i32, i32
  }
  func.func @transform_2(%arg0: i32, %arg1: i32) -> (i32, i32, i32) {
    %c0_i32 = arith.constant 0 : i32
    %c0_i32_0 = arith.constant 0 : i32
    %c0_i32_1 = arith.constant 0 : i32
    return %arg0, %c0_i32, %c0_i32_0 : i32, i32, i32
  }
}

</mosaic_0001>

<llo_original>
// kernel: tpu_custom_call.1
$region0: #{tpu_custom_call.1}
  #allocation0 [shape = 'u32[]', space=smem, size = 0x4, offset = 0x4, fixed_abs, tag = 'smem constant byte address 0x4 - core index']
  #allocation1 [shape = 'u32[144,128]{1,0:T(1,128)}', space=vmem, size = 0x12000, scoped, tag = 'internal scratch']
  %s0 = inlined_call_operand.hbm [shape: f32[16,128], index: 0, kind: input, shape index: {}]
  %s1 = inlined_call_operand.hbm [shape: f32[16,128], index: 1, kind: input, shape index: {}]
  %s2 = inlined_call_operand.hbm [shape: f32[1,8,128], index: 2, kind: output, shape index: {}]
  %s3 = sld [smem:[#allocation0]]
  $region30: #{tpu_custom_call.1} parent=0
    _
  %s5 = ssub.s32 1, %s3
  %s6 = scalar_select 0, %s5, %s3
  $region1: #{tpu_custom_call.1} parent=0
    #allocation2 [shape = 'u8[8192]{0}', space=vmem, size = 0x2000, scoped, tag = 'input window, operand 0, single buffered']
    #allocation3 [shape = 's32[1]{0}', space=sflag, size = 0x4, scoped, tag = 'scoped memory for tpu_custom_call.1']
    #allocation4 [shape = 's32[1]{0}', space=sflag, size = 0x4, scoped, tag = 'scoped memory for tpu_custom_call.1']
    #allocation5 [shape = 'u8[8192]{0}', space=vmem, size = 0x2000, scoped, tag = 'input window, operand 1, single buffered']
    #allocation6 [shape = 's32[1]{0}', space=sflag, size = 0x4, scoped, tag = 'scoped memory for tpu_custom_call.1']
    #allocation7 [shape = 'u8[4096]{0}', space=vmem, size = 0x1000, scoped, tag = 'output window, operand 0, single buffered']
    %7 = vsyncpa [#allocation3], 0
    %8 = vsyncpa [#allocation6], 0
    %9 = vsyncpa [#allocation4], 0
    // Predicated region
    $region2: #{tpu_custom_call.1} parent=1 // pred_check
      _
    $region3: #{tpu_custom_call.1} parent=1 // pred_check_branch
      %11 = sbr.rel (0) target = $region5
    $region4: #{tpu_custom_call.1} parent=1 // pred_region
      %s12 = sadd.s32 0, 0
      %s13 = smul.u32 2, %s12
      %s15 = ssub.s32 256, 256
      %16 = vsyncadd [#allocation3], %s15
      %s17 = smul.addr %s13, 128
      %s18 = scalar_lea.hbm %s0, %s17
      %s19 = sshll.u32 [#allocation2], 4
      %s20 = int_to_ptr.vmem [resolvable:$true] %s19
      %25 = dma.hbm_to_vmem [thread:$0]  %s18, 256, %s20, [#allocation3], 128, 128, 8
    $region5: #{tpu_custom_call.1} parent=1 // pred_fallthru
      _
    // Predicated region
    $region6: #{tpu_custom_call.1} parent=1 // pred_check
      _
    $region7: #{tpu_custom_call.1} parent=1 // pred_check_branch
      %27 = sbr.rel (0) target = $region9
    $region8: #{tpu_custom_call.1} parent=1 // pred_region
      %s28 = sadd.s32 0, 0
      %s29 = smul.u32 2, %s28
      %s31 = ssub.s32 256, 256
      %32 = vsyncadd [#allocation6], %s31
      %s33 = smul.addr %s29, 128
      %s34 = scalar_lea.hbm %s1, %s33
      %s35 = sshll.u32 [#allocation5], 4
      %s36 = int_to_ptr.vmem [resolvable:$true] %s35
      %41 = dma.hbm_to_vmem [thread:$0]  %s34, 256, %s36, [#allocation6], 128, 128, 8
    $region9: #{tpu_custom_call.1} parent=1 // pred_fallthru
      _
    // Predicated region
    $region10: #{tpu_custom_call.1} parent=1 // pred_check
      _
    $region11: #{tpu_custom_call.1} parent=1 // pred_check_branch
      %43 = sbr.rel (0) target = $region13
    $region12: #{tpu_custom_call.1} parent=1 // pred_region
      %44 = dma.done [#allocation3], 256
    $region13: #{tpu_custom_call.1} parent=1 // pred_fallthru
      _
    // Predicated region
    $region14: #{tpu_custom_call.1} parent=1 // pred_check
      _
    $region15: #{tpu_custom_call.1} parent=1 // pred_check_branch
      %46 = sbr.rel (0) target = $region17
    $region16: #{tpu_custom_call.1} parent=1 // pred_region
      %47 = dma.done [#allocation6], 256
    $region17: #{tpu_custom_call.1} parent=1 // pred_fallthru
      _
    %s48 = sadd.s32 0, 0
    %s49 = smul.u32 2, %s48
    %s50 = sadd.s32 0, 0
    %s51 = smul.u32 2, %s50
    %p52 = scmp.eq.s32.totalorder 0, 0
    // Predicated region
    $region18: #{tpu_custom_call.1} parent=1 // pred_check
      %p53 = pneg %p52
    $region19: #{tpu_custom_call.1} parent=1 // pred_check_branch
      %55 = sbr.rel (%p53) target = $region21
    $region20: #{tpu_custom_call.1} parent=1 // pred_region
      %56 = vst [vmem:[#allocation7] sm:$0xff] 0.0
    $region21: #{tpu_custom_call.1} parent=1 // pred_fallthru
      _
    %v57 = vld [vmem:[#allocation2] sm:$0xff]
    %v58 = vld [vmem:[#allocation2 + $0x8] sm:$0xff]
    %v59 = vld [vmem:[#allocation5] sm:$0xff]
    %v60 = vld [vmem:[#allocation5 + $0x8] sm:$0xff]
    %v61 = vlog2.pop %v57
    %v62 = vmul.f32 %v61, 0.6931472
    %v63 = vlog2.pop %v58
    %v64 = vmul.f32 %v63, 0.6931472
    %v65 = vmax.f32 %v62, -100.0
    %v66 = vmax.f32 %v64, -100.0
    %v67 = vsub.f32 1.0, %v57
    %v68 = vsub.f32 1.0, %v58
    %v69 = vlog2.pop %v67
    %v70 = vmul.f32 %v69, 0.6931472
    %v71 = vlog2.pop %v68
    %v72 = vmul.f32 %v71, 0.6931472
    %v73 = vmax.f32 %v70, -100.0
    %v74 = vmax.f32 %v72, -100.0
    %v75 = vsub.f32 %v65, %v73
    %v76 = vsub.f32 %v66, %v74
    %v77 = vmul.f32 %v59, %v75
    %v78 = vmul.f32 %v60, %v76
    %v79 = vadd.f32 %v73, %v77
    %v80 = vadd.f32 %v74, %v78
    %v81 = vsub.f32 0.0, %v79
    %v82 = vsub.f32 0.0, %v80
    %v83 = vld [vmem:[#allocation7] sm:$0xff]
    %v84 = vadd.f32 %v81, %v82
    %v85 = vadd.f32 %v83, %v84
    %86 = vst [vmem:[#allocation7] sm:$0xff] %v85
    // Predicated region
    $region22: #{tpu_custom_call.1} parent=1 // pred_check
      _
    $region23: #{tpu_custom_call.1} parent=1 // pred_check_branch
      %88 = sbr.rel (0) target = $region25
    $region24: #{tpu_custom_call.1} parent=1 // pred_region
      %s90 = ssub.s32 128, 128
      %91 = vsyncadd [#allocation4], %s90
      %s93 = sshll.u32 [#allocation7], 4
      %s94 = int_to_ptr.vmem [resolvable:$true] %s93
      %96 = dma.vmem_to_hbm [thread:$0]  %s94, 128, %s2, [#allocation4]
    $region25: #{tpu_custom_call.1} parent=1 // pred_fallthru
      _
    // Predicated region
    $region26: #{tpu_custom_call.1} parent=1 // pred_check
      _
    $region27: #{tpu_custom_call.1} parent=1 // pred_check_branch
      %98 = sbr.rel (0) target = $region29
    $region28: #{tpu_custom_call.1} parent=1 // pred_region
      %99 = dma.done [#allocation4], 128
    $region29: #{tpu_custom_call.1} parent=1 // pred_fallthru
      _
    %100 = vsyncpa [#allocation3], 1
    %101 = vsyncpa [#allocation6], 1
    %102 = vsyncpa [#allocation4], 1

</llo_original>
